<compile_context>
chip_gen: v6e
topology: v6e:2x2x1
jax: 0.10.0
libtpu: 0.0.40
codegen_flags: <defaults>
</compile_context>

<pallas_src>
import numpy as np
import jax
import jax.numpy as jnp
from jax.experimental import pallas as pl
from jax.experimental.pallas import tpu as pltpu


# Per-step fixed overhead (~0.35 us) dominates at these layer widths, so use a
# large batch tile.  1024 is safe on all of v5e/v6e/v7x; sweep 512-2048 on the
# 128 MiB-VMEM chips if desired.
_MAX_TILE_B = 1024


def _round_up(x, m):
    return (x + m - 1) // m * m


def _critic_kernel(obs_ref, act_ref,
                   w1_ref, b1_ref,
                   w2s_ref, w2a_ref, b2_ref,
                   w3_ref, b3_ref,
                   out_ref):
    # state_body: xs = relu(obs @ W1 + b1)   (f32 operands, f32 accumulation)
    xs = jnp.dot(obs_ref[...], w1_ref[...], preferred_element_type=jnp.float32)
    xs = jnp.maximum(xs + b1_ref[...], 0.0)

    # critic_body on concat(xs, action): the (H1+A, H2) weight was split
    # host-side, so the concat never materializes -- two MXU passes, all
    # intermediates stay in vregs (no misaligned VMEM scratch traffic).
    h = jnp.dot(xs, w2s_ref[...], preferred_element_type=jnp.float32)
    h = h + jnp.dot(act_ref[...], w2a_ref[...], preferred_element_type=jnp.float32)
    h = jnp.maximum(h + b2_ref[...], 0.0)

    # fc_critic head, computed lane-dense: (1, H2) x (tile_b, H2)^T -> (1, tile_b)
    # (trans_b matmul).  Lane-dense output block -> unmasked vector stores.
    value_row = jax.lax.dot_general(
        w3_ref[...], h, (((1,), (1,)), ((), ())),
        preferred_element_type=jnp.float32)
    value_row = value_row + b3_ref[0, 0]          # scalar bias from SMEM
    out_ref[...] = value_row.reshape(out_ref.shape).astype(out_ref.dtype)


def critic_net_forward(obs, action, params):
    """Fused CriticNet forward pass. Returns value of shape (B, 1), float32."""
    B, S = obs.shape
    A = action.shape[1]
    w1, b1 = params["w1"], params["b1"]
    w2s, w2a, b2 = params["w2s"], params["w2a"], params["b2"]
    w3, b3 = params["w3"], params["b3"]
    H1 = w1.shape[1]
    H2 = w2s.shape[1]
    assert w2s.shape[0] == H1 and w2a.shape == (A, H2)

    # Batch tile: multiple of 8 (f32 sublanes), as large as possible, and >= 2
    # tiles whenever B allows so dimension_semantics=("parallel",) actually
    # spreads work across both TensorCores on v7x (no effect on v5e/v6e).
    tile_b = max(8, min(_MAX_TILE_B, _round_up(pl.cdiv(B, 2), 8)))
    num_tiles = pl.cdiv(B, tile_b)

    # Scoped-VMEM limit derived from the real footprint: input/output tiles are
    # double-buffered by the pipeline, weights are constant-index resident
    # (assume worst-case 2x residency); generous headroom, safe on v7x (64 MiB).
    f32b = 4
    weight_bytes = (S * H1 + H1 + H1 * H2 + A * H2 + H2 + H2 + 1) * f32b
    io_bytes = 2 * tile_b * (S + A + 1) * f32b
    vmem_limit = int(min(32 << 20, max(8 << 20, 4 * (2 * weight_bytes + io_bytes))))

    out = pl.pallas_call(
        _critic_kernel,
        out_shape=jax.ShapeDtypeStruct((num_tiles, 1, tile_b), jnp.float32),
        grid_spec=pltpu.PrefetchScalarGridSpec(
            num_scalar_prefetch=0,
            grid=(num_tiles,),
            in_specs=[
                # Batch-tiled activations, consumed directly in f32 (no
                # host-side pad/cast copy).  Partial last block is handled by
                # Pallas; padded rows yield garbage outputs that are sliced
                # off below (no cross-row reduction -> safe).
                pl.BlockSpec((tile_b, S), lambda i: (i, 0)),
                pl.BlockSpec((tile_b, A), lambda i: (i, 0)),
                # Weights/biases: constant block index -> fetched once and
                # VMEM-resident across the grid.  NOTE: keep these small
                # relative to VMEM (they may be double-buffered).
                pl.BlockSpec((S, H1), lambda i: (0, 0)),
                pl.BlockSpec((1, H1), lambda i: (0, 0)),
                pl.BlockSpec((H1, H2), lambda i: (0, 0)),
                pl.BlockSpec((A, H2), lambda i: (0, 0)),
                pl.BlockSpec((1, H2), lambda i: (0, 0)),
                pl.BlockSpec((1, H2), lambda i: (0, 0)),
                # Scalar fc_critic bias -> SMEM.
                pl.BlockSpec((1, 1), lambda i: (0, 0),
                             memory_space=pltpu.MemorySpace.SMEM),
            ],
            # Lane-dense output: one (1, tile_b) row per batch tile.
            out_specs=pl.BlockSpec((1, 1, tile_b), lambda i: (i, 0, 0)),
        ),
        compiler_params=pltpu.CompilerParams(
            dimension_semantics=("parallel",),
            vmem_limit_bytes=vmem_limit,
        ),
    )(obs, action, w1, b1, w2s, w2a, b2, w3, b3)

    # (num_tiles, 1, tile_b) -> (B, 1); padded tail lanes dropped.
    return out.reshape(num_tiles * tile_b)[:B].reshape(B, 1)


def init_params(key, state_dim, action_dim, h1, h2):
    """layer_init-style init: uniform(-bound, bound), bound = 1/sqrt(in_features)
    for the hidden layers and 3e-4 for fc_critic.  All f32 (exact parity with
    the PyTorch module).  critic_body's Linear(H1+A, H2) weight is stored
    pre-split into (H1, H2) + (A, H2) so the kernel never materializes the
    concat (mathematically identical)."""
    ks = jax.random.split(key, 7)

    def u(k, shape, bound):
        return jax.random.uniform(k, shape, jnp.float32, -bound, bound)

    b1_bound = 1.0 / np.sqrt(state_dim)
    b2_bound = 1.0 / np.sqrt(h1 + action_dim)   # in_features of Linear(H1+A, H2)
    b3_bound = 3e-4

    return {
        "w1": u(ks[0], (state_dim, h1), b1_bound),       # state_body weight
        "b1": u(ks[1], (1, h1), b1_bound),
        "w2s": u(ks[2], (h1, h2), b2_bound),             # critic_body rows [0, H1)
        "w2a": u(ks[3], (action_dim, h2), b2_bound),     # critic_body rows [H1, H1+A)
        "b2": u(ks[4], (1, h2), b2_bound),
        "w3": u(ks[5], (1, h2), b3_bound),               # fc_critic.weight
        "b3": u(ks[6], (1, 1), b3_bound),                # fc_critic.bias
    }


def _reference_forward(obs, action, p):
    """Pure-JAX f32 reference (same math as the PyTorch module)."""
    xs = jnp.maximum(obs @ p["w1"] + p["b1"], 0.0)
    h = jnp.maximum(xs @ p["w2s"] + action @ p["w2a"] + p["b2"], 0.0)
    return jnp.sum(h * p["w3"], axis=-1, keepdims=True) + p["b3"][0, 0]


if __name__ == "__main__":
    # Small demo shapes.  B=12 exercises one full tile + one partial tail tile
    # (and a 2-wide grid for megacore sharding).  The tiling/pipelining pays
    # off at training-scale batches (>= hundreds).
    B, S, A, H1, H2 = 12, 16, 8, 32, 32

    key = jax.random.PRNGKey(0)
    k_obs, k_act, k_params = jax.random.split(key, 3)

    obs = jax.random.normal(k_obs, (B, S), jnp.float32)
    action = jax.random.normal(k_act, (B, A), jnp.float32)
    params = init_params(k_params, S, A, H1, H2)

    value = jax.block_until_ready(critic_net_forward(obs, action, params))

    ref = _reference_forward(obs, action, params)
    np.testing.assert_allclose(np.asarray(value), np.asarray(ref),
                               rtol=2e-2, atol=1e-3)
    assert value.shape == (B, 1)
    print("KERNEL_OK")
</pallas_src>

<mosaic_0001>
module attributes {stable_mosaic.version = 11 : i64} {
  func.func @_critic_kernel(%arg0: i32, %arg1: memref<8x16xf32, #tpu.memory_space<vmem>>, %arg2: memref<8x8xf32, #tpu.memory_space<vmem>>, %arg3: memref<16x32xf32, #tpu.memory_space<vmem>>, %arg4: memref<1x32xf32, #tpu.memory_space<vmem>>, %arg5: memref<32x32xf32, #tpu.memory_space<vmem>>, %arg6: memref<8x32xf32, #tpu.memory_space<vmem>>, %arg7: memref<1x32xf32, #tpu.memory_space<vmem>>, %arg8: memref<1x32xf32, #tpu.memory_space<vmem>>, %arg9: memref<1x1xf32, #tpu.memory_space<smem>>, %arg10: memref<1x1x8xf32, #tpu.memory_space<vmem>>) attributes {dimension_semantics = [#tpu.dimension_semantics<parallel>], iteration_bounds = array<i64: 2>, scalar_prefetch = 0 : i64, scratch_operands = 0 : i64, tpu.core_type = #tpu.core_type<tc>, window_params = [{transform_indices = @transform_0, window_bounds = array<i64: 8, 16>}, {transform_indices = @transform_1, window_bounds = array<i64: 8, 8>}, {pipeline_mode = #tpu.pipeline_mode<synchronous>, transform_indices = @transform_2, window_bounds = array<i64: 16, 32>}, {pipeline_mode = #tpu.pipeline_mode<synchronous>, transform_indices = @transform_3, window_bounds = array<i64: 1, 32>}, {pipeline_mode = #tpu.pipeline_mode<synchronous>, transform_indices = @transform_4, window_bounds = array<i64: 32, 32>}, {pipeline_mode = #tpu.pipeline_mode<synchronous>, transform_indices = @transform_5, window_bounds = array<i64: 8, 32>}, {pipeline_mode = #tpu.pipeline_mode<synchronous>, transform_indices = @transform_6, window_bounds = array<i64: 1, 32>}, {pipeline_mode = #tpu.pipeline_mode<synchronous>, transform_indices = @transform_7, window_bounds = array<i64: 1, 32>}, {transform_indices = @transform_8, window_bounds = array<i64: 1, 1>}, {transform_indices = @transform_9, window_bounds = array<i64: 1, 1, 8>}]} {
    %c0 = arith.constant 0 : index
    %c0_0 = arith.constant 0 : index
    %0 = vector.load %arg1[%c0, %c0_0] : memref<8x16xf32, #tpu.memory_space<vmem>>, vector<8x16xf32>
    %c0_1 = arith.constant 0 : index
    %c0_2 = arith.constant 0 : index
    %1 = vector.load %arg3[%c0_1, %c0_2] : memref<16x32xf32, #tpu.memory_space<vmem>>, vector<16x32xf32>
    %cst = arith.constant dense<0.000000e+00> : vector<8x32xf32>
    %2 = tpu.matmul %0, %1, %cst {dimension_numbers = #tpu.dot_dimension_numbers<[1], [0], [0], [1], [0, 0, 1, 1], [], []>} : vector<8x16xf32>, vector<16x32xf32>, vector<8x32xf32> -> vector<8x32xf32>
    %c0_3 = arith.constant 0 : index
    %c0_4 = arith.constant 0 : index
    %3 = vector.load %arg4[%c0_3, %c0_4] : memref<1x32xf32, #tpu.memory_space<vmem>>, vector<1x32xf32>
    %4 = vector.broadcast %3 : vector<1x32xf32> to vector<8x32xf32>
    %5 = arith.addf %2, %4 : vector<8x32xf32>
    %cst_5 = arith.constant 0.000000e+00 : f32
    %6 = vector.broadcast %cst_5 : f32 to vector<8x32xf32>
    %7 = arith.maximumf %5, %6 : vector<8x32xf32>
    %c0_6 = arith.constant 0 : index
    %c0_7 = arith.constant 0 : index
    %8 = vector.load %arg5[%c0_6, %c0_7] : memref<32x32xf32, #tpu.memory_space<vmem>>, vector<32x32xf32>
    %cst_8 = arith.constant dense<0.000000e+00> : vector<8x32xf32>
    %9 = tpu.matmul %7, %8, %cst_8 {dimension_numbers = #tpu.dot_dimension_numbers<[1], [0], [0], [1], [0, 0, 1, 1], [], []>} : vector<8x32xf32>, vector<32x32xf32>, vector<8x32xf32> -> vector<8x32xf32>
    %c0_9 = arith.constant 0 : index
    %c0_10 = arith.constant 0 : index
    %10 = vector.load %arg2[%c0_9, %c0_10] : memref<8x8xf32, #tpu.memory_space<vmem>>, vector<8x8xf32>
    %c0_11 = arith.constant 0 : index
    %c0_12 = arith.constant 0 : index
    %11 = vector.load %arg6[%c0_11, %c0_12] : memref<8x32xf32, #tpu.memory_space<vmem>>, vector<8x32xf32>
    %cst_13 = arith.constant dense<0.000000e+00> : vector<8x32xf32>
    %12 = tpu.matmul %10, %11, %cst_13 {dimension_numbers = #tpu.dot_dimension_numbers<[1], [0], [0], [1], [0, 0, 1, 1], [], []>} : vector<8x8xf32>, vector<8x32xf32>, vector<8x32xf32> -> vector<8x32xf32>
    %13 = arith.addf %9, %12 : vector<8x32xf32>
    %c0_14 = arith.constant 0 : index
    %c0_15 = arith.constant 0 : index
    %14 = vector.load %arg7[%c0_14, %c0_15] : memref<1x32xf32, #tpu.memory_space<vmem>>, vector<1x32xf32>
    %15 = vector.broadcast %14 : vector<1x32xf32> to vector<8x32xf32>
    %16 = arith.addf %13, %15 : vector<8x32xf32>
    %cst_16 = arith.constant 0.000000e+00 : f32
    %17 = vector.broadcast %cst_16 : f32 to vector<8x32xf32>
    %18 = arith.maximumf %16, %17 : vector<8x32xf32>
    %c0_17 = arith.constant 0 : index
    %c0_18 = arith.constant 0 : index
    %19 = vector.load %arg8[%c0_17, %c0_18] : memref<1x32xf32, #tpu.memory_space<vmem>>, vector<1x32xf32>
    %cst_19 = arith.constant dense<0.000000e+00> : vector<1x8xf32>
    %20 = tpu.matmul %19, %18, %cst_19 {dimension_numbers = #tpu.dot_dimension_numbers<[1], [1], [0], [0], [0, 0, 1, 0], [], []>} : vector<1x32xf32>, vector<8x32xf32>, vector<1x8xf32> -> vector<1x8xf32>
    %c0_20 = arith.constant 0 : index
    %c0_21 = arith.constant 0 : index
    %21 = memref.load %arg9[%c0_20, %c0_21] : memref<1x1xf32, #tpu.memory_space<smem>>
    %22 = vector.broadcast %21 : f32 to vector<1x8xf32>
    %23 = arith.addf %20, %22 : vector<1x8xf32>
    %24 = vector.shape_cast %23 : vector<1x8xf32> to vector<1x1x8xf32>
    %c0_22 = arith.constant 0 : index
    %c0_23 = arith.constant 0 : index
    %c0_24 = arith.constant 0 : index
    %25 = vector.load %arg10[%c0_22, %c0_23, %c0_24] : memref<1x1x8xf32, #tpu.memory_space<vmem>>, vector<1x1x8xf32>
    tpu.vector_store %arg10[%c0_22, %c0_23, %c0_24], %24 {strides = array<i32>} : memref<1x1x8xf32, #tpu.memory_space<vmem>>, vector<1x1x8xf32>,
    return
  }
  func.func @transform_0(%arg0: i32) -> (i32, i32) {
    %c0_i32 = arith.constant 0 : i32
    %c0_i32_0 = arith.constant 0 : i32
    return %arg0, %c0_i32 : i32, i32
  }
  func.func @transform_1(%arg0: i32) -> (i32, i32) {
    %c0_i32 = arith.constant 0 : i32
    %c0_i32_0 = arith.constant 0 : i32
    return %arg0, %c0_i32 : i32, i32
  }
  func.func @transform_2(%arg0: i32) -> (i32, i32) {
    %c0_i32 = arith.constant 0 : i32
    %c0_i32_0 = arith.constant 0 : i32
    %c0_i32_1 = arith.constant 0 : i32
    return %c0_i32, %c0_i32_0 : i32, i32
  }
  func.func @transform_3(%arg0: i32) -> (i32, i32) {
    %c0_i32 = arith.constant 0 : i32
    %c0_i32_0 = arith.constant 0 : i32
    %c0_i32_1 = arith.constant 0 : i32
    return %c0_i32, %c0_i32_0 : i32, i32
  }
  func.func @transform_4(%arg0: i32) -> (i32, i32) {
    %c0_i32 = arith.constant 0 : i32
    %c0_i32_0 = arith.constant 0 : i32
    %c0_i32_1 = arith.constant 0 : i32
    return %c0_i32, %c0_i32_0 : i32, i32
  }
  func.func @transform_5(%arg0: i32) -> (i32, i32) {
    %c0_i32 = arith.constant 0 : i32
    %c0_i32_0 = arith.constant 0 : i32
    %c0_i32_1 = arith.constant 0 : i32
    return %c0_i32, %c0_i32_0 : i32, i32
  }
  func.func @transform_6(%arg0: i32) -> (i32, i32) {
    %c0_i32 = arith.constant 0 : i32
    %c0_i32_0 = arith.constant 0 : i32
    %c0_i32_1 = arith.constant 0 : i32
    return %c0_i32, %c0_i32_0 : i32, i32
  }
  func.func @transform_7(%arg0: i32) -> (i32, i32) {
    %c0_i32 = arith.constant 0 : i32
    %c0_i32_0 = arith.constant 0 : i32
    %c0_i32_1 = arith.constant 0 : i32
    return %c0_i32, %c0_i32_0 : i32, i32
  }
  func.func @transform_8(%arg0: i32) -> (i32, i32) {
    %c0_i32 = arith.constant 0 : i32
    %c0_i32_0 = arith.constant 0 : i32
    %c0_i32_1 = arith.constant 0 : i32
    return %c0_i32, %c0_i32_0 : i32, i32
  }
  func.func @transform_9(%arg0: i32) -> (i32, i32, i32) {
    %c0_i32 = arith.constant 0 : i32
    %c0_i32_0 = arith.constant 0 : i32
    %c0_i32_1 = arith.constant 0 : i32
    return %arg0, %c0_i32, %c0_i32_0 : i32, i32, i32
  }
}

</mosaic_0001>

<llo_original>
// kernel: tpu_custom_call.1
$region0: #{tpu_custom_call.1}
  #allocation0 [shape = 'u32[]', space=smem, size = 0x4, offset = 0x4, fixed_abs, tag = 'smem constant byte address 0x4 - core index']
  #allocation1 [shape = 'u32[144,128]{1,0:T(1,128)}', space=vmem, size = 0x12000, scoped, tag = 'internal scratch']
  #allocation2 [shape = 'f32[1,1]{1,0:T(1,128)S(6)}', space=smem, size = 0x200, scoped, tag = 'scoped memory for tpu_custom_call.1']
  %s0 = inlined_call_operand.hbm [shape: f32[12,16], index: 0, kind: input, shape index: {}]
  %s1 = inlined_call_operand.vmem [shape: f32[12,8], index: 1, kind: input, shape index: {}]
  %s2 = inlined_call_operand.hbm [shape: f32[16,32], index: 2, kind: input, shape index: {}]
  %s3 = inlined_call_operand.vmem [shape: f32[1,32], index: 3, kind: input, shape index: {}]
  %s4 = inlined_call_operand.vmem [shape: f32[32,32], index: 4, kind: input, shape index: {}]
  %s5 = inlined_call_operand.hbm [shape: f32[8,32], index: 5, kind: input, shape index: {}]
  %s6 = inlined_call_operand.vmem [shape: f32[1,32], index: 6, kind: input, shape index: {}]
  %s7 = inlined_call_operand.vmem [shape: f32[1,32], index: 7, kind: input, shape index: {}]
  %s8 = inlined_call_operand.<no memory space> [shape: f32[1,1], index: 8, kind: input, shape index: {}]
  %s9 = inlined_call_operand.hbm [shape: f32[2,1,8], index: 9, kind: output, shape index: {}]
  %s10 = sld [smem:[#allocation0]]
  $region81: #{tpu_custom_call.1} parent=0
    _
  %s12 = ssub.s32 1, %s10
  %s13 = scalar_select 0, %s12, %s10
  %14 = sst [smem:[#allocation2]] %s8
  $region1: #{tpu_custom_call.1} parent=0
    #allocation3 [shape = 'u8[8192]{0}', space=vmem, size = 0x2000, scoped, tag = 'input window, operand 0']
    #allocation4 [shape = 's32[2]{0}', space=sflag, size = 0x8, scoped, tag = 'scoped memory for tpu_custom_call.1']
    #allocation5 [shape = 's32[2]{0}', space=sflag, size = 0x8, scoped, tag = 'scoped memory for tpu_custom_call.1']
    #allocation6 [shape = 'u8[8192]{0}', space=vmem, size = 0x2000, scoped, tag = 'input window, operand 2, single buffered']
    #allocation7 [shape = 's32[1]{0}', space=sflag, size = 0x4, scoped, tag = 'scoped memory for tpu_custom_call.1']
    #allocation8 [shape = 'u8[4096]{0}', space=vmem, size = 0x1000, scoped, tag = 'input window, operand 5, single buffered']
    #allocation9 [shape = 'u8[1024]{0}', space=vmem, size = 0x400, scoped, tag = 'output window, operand 0']
    %15 = vsyncpa [#allocation4], 0
    %s16 = scalar_lea.sflag [#allocation4], 1
    %17 = vsyncpa %s16, 0
    %18 = vsyncpa [#allocation7], 0
    %19 = vsyncpa [#allocation5], 0
    %s20 = scalar_lea.sflag [#allocation5], 1
    %21 = vsyncpa %s20, 0
    loop: start=0, step=1, limit=4
    $region2: #{tpu_custom_call.1} parent=1 // loop_pre_header
      _
    $region3: #{tpu_custom_call.1} parent=1 // loop_header
      %s23 = sphi 0, %s27
      %p24 = scmp.ge.s32.totalorder %s23, 4
      %s33 = sphi 0, %s35
      %s36 = sphi 0, %s33
      %s37 = sphi 0, %s36
      %s53 = sphi 0, %s37
      %s59 = sphi 0, %s61
      %s62 = sphi 0, %s59
      %s63 = sphi 0, %s62
      %s79 = sphi 0, %s63
      %s83 = sphi 0, %s83
      %s85 = sphi 0, %s83
      %s86 = sphi 0, %s85
      %s100 = sphi 0, %s86
      %s104 = sphi 0, %s104
      %s106 = sphi 0, %s104
      %s107 = sphi 0, %s106
      %s121 = sphi 0, %s107
      %s125 = sphi 0, %s125
      %s127 = sphi 0, %s125
      %s128 = sphi 0, %s127
      %s142 = sphi 0, %s128
      %s146 = sphi 0, %s146
      %s148 = sphi 0, %s146
      %s149 = sphi 0, %s148
      %s163 = sphi 0, %s149
      %s167 = sphi 0, %s167
      %s169 = sphi 0, %s167
      %s170 = sphi 0, %s169
      %s184 = sphi 0, %s170
      %s188 = sphi 0, %s188
      %s190 = sphi 0, %s188
      %s191 = sphi 0, %s190
      %s205 = sphi 0, %s191
      %s209 = sphi 0, %s209
      %s211 = sphi 0, %s209
      %s212 = sphi 0, %s211
      %s226 = sphi 0, %s212
      %s232 = sphi 0, %s234
      %s235 = sphi 0, %s232
      %s236 = sphi 0, %s235
      %s252 = sphi 0, %s236
    $region4: #{tpu_custom_call.1} parent=1 // loop_header_branch
      %26 = sbr.rel (%p24) target = $region8
    $region5: #{tpu_custom_call.1} parent=1 // loop_body
      %s28 = ssub.s32 %s23, 1
      %s29 = ssub.s32 %s23, 2
      %s30 = sadd.s32 %s23, 1
      %s31 = ssub.s32 %s23, %s30
      %p32 = scmp.eq.s32.totalorder %s31, 0
      %s34 = sadd.s32 %s33, 1
      %s35 = scalar_select %p32, %s33, %s34
      %p38 = pneg %p32
      %p39 = scmp.eq.s32.totalorder %s23, 1
      %p40 = por %p38, %p39
      %p41 = scmp.ne.s32.totalorder %s33, %s36
      %p42 = scmp.eq.s32.totalorder %s23, 0
      %p43 = por %p41, %p42
      %p44 = scmp.ne.s32.totalorder %s33, %s36
      %p45 = scmp.eq.s32.totalorder %s28, 1
      %p46 = por %p44, %p45
      %p47 = scmp.ne.s32.totalorder %s36, %s37
      %p48 = scmp.eq.s32.totalorder %s28, 0
      %p49 = por %p47, %p48
      %p50 = scmp.ne.s32.totalorder %s36, %s37
      %p51 = scmp.eq.s32.totalorder %s29, 1
      %p52 = por %p50, %p51
      %p54 = scmp.ne.s32.totalorder %s37, %s53
      %p55 = scmp.eq.s32.totalorder %s29, 0
      %p56 = por %p54, %p55
      %s57 = ssub.s32 %s23, %s30
      %p58 = scmp.eq.s32.totalorder %s57, 0
      %s60 = sadd.s32 %s59, 1
      %s61 = scalar_select %p58, %s59, %s60
      %p64 = pneg %p58
      %p65 = scmp.eq.s32.totalorder %s23, 1
      %p66 = por %p64, %p65
      %p67 = scmp.ne.s32.totalorder %s59, %s62
      %p68 = scmp.eq.s32.totalorder %s23, 0
      %p69 = por %p67, %p68
      %p70 = scmp.ne.s32.totalorder %s59, %s62
      %p71 = scmp.eq.s32.totalorder %s28, 1
      %p72 = por %p70, %p71
      %p73 = scmp.ne.s32.totalorder %s62, %s63
      %p74 = scmp.eq.s32.totalorder %s28, 0
      %p75 = por %p73, %p74
      %p76 = scmp.ne.s32.totalorder %s62, %s63
      %p77 = scmp.eq.s32.totalorder %s29, 1
      %p78 = por %p76, %p77
      %p80 = scmp.ne.s32.totalorder %s63, %s79
      %p81 = scmp.eq.s32.totalorder %s29, 0
      %p82 = por %p80, %p81
      %s84 = sadd.s32 %s83, 1
      %p87 = scmp.eq.s32.totalorder %s23, 1
      %p88 = scmp.ne.s32.totalorder %s83, %s85
      %p89 = scmp.eq.s32.totalorder %s23, 0
      %p90 = por %p88, %p89
      %p91 = scmp.ne.s32.totalorder %s83, %s85
      %p92 = scmp.eq.s32.totalorder %s28, 1
      %p93 = por %p91, %p92
      %p94 = scmp.ne.s32.totalorder %s85, %s86
      %p95 = scmp.eq.s32.totalorder %s28, 0
      %p96 = por %p94, %p95
      %p97 = scmp.ne.s32.totalorder %s85, %s86
      %p98 = scmp.eq.s32.totalorder %s29, 1
      %p99 = por %p97, %p98
      %p101 = scmp.ne.s32.totalorder %s86, %s100
      %p102 = scmp.eq.s32.totalorder %s29, 0
      %p103 = por %p101, %p102
      %s105 = sadd.s32 %s104, 1
      %p108 = scmp.eq.s32.totalorder %s23, 1
      %p109 = scmp.ne.s32.totalorder %s104, %s106
      %p110 = scmp.eq.s32.totalorder %s23, 0
      %p111 = por %p109, %p110
      %p112 = scmp.ne.s32.totalorder %s104, %s106
      %p113 = scmp.eq.s32.totalorder %s28, 1
      %p114 = por %p112, %p113
      %p115 = scmp.ne.s32.totalorder %s106, %s107
      %p116 = scmp.eq.s32.totalorder %s28, 0
      %p117 = por %p115, %p116
      %p118 = scmp.ne.s32.totalorder %s106, %s107
      %p119 = scmp.eq.s32.totalorder %s29, 1
      %p120 = por %p118, %p119
      %p122 = scmp.ne.s32.totalorder %s107, %s121
      %p123 = scmp.eq.s32.totalorder %s29, 0
      %p124 = por %p122, %p123
      %s126 = sadd.s32 %s125, 1
      %p129 = scmp.eq.s32.totalorder %s23, 1
      %p130 = scmp.ne.s32.totalorder %s125, %s127
      %p131 = scmp.eq.s32.totalorder %s23, 0
      %p132 = por %p130, %p131
      %p133 = scmp.ne.s32.totalorder %s125, %s127
      %p134 = scmp.eq.s32.totalorder %s28, 1
      %p135 = por %p133, %p134
      %p136 = scmp.ne.s32.totalorder %s127, %s128
      %p137 = scmp.eq.s32.totalorder %s28, 0
      %p138 = por %p136, %p137
      %p139 = scmp.ne.s32.totalorder %s127, %s128
      %p140 = scmp.eq.s32.totalorder %s29, 1
      %p141 = por %p139, %p140
      %p143 = scmp.ne.s32.totalorder %s128, %s142
      %p144 = scmp.eq.s32.totalorder %s29, 0
      %p145 = por %p143, %p144
      %s147 = sadd.s32 %s146, 1
      %p150 = scmp.eq.s32.totalorder %s23, 1
      %p151 = scmp.ne.s32.totalorder %s146, %s148
      %p152 = scmp.eq.s32.totalorder %s23, 0
      %p153 = por %p151, %p152
      %p154 = scmp.ne.s32.totalorder %s146, %s148
      %p155 = scmp.eq.s32.totalorder %s28, 1
      %p156 = por %p154, %p155
      %p157 = scmp.ne.s32.totalorder %s148, %s149
      %p158 = scmp.eq.s32.totalorder %s28, 0
      %p159 = por %p157, %p158
      %p160 = scmp.ne.s32.totalorder %s148, %s149
      %p161 = scmp.eq.s32.totalorder %s29, 1
      %p162 = por %p160, %p161
      %p164 = scmp.ne.s32.totalorder %s149, %s163
      %p165 = scmp.eq.s32.totalorder %s29, 0
      %p166 = por %p164, %p165
      %s168 = sadd.s32 %s167, 1
      %p171 = scmp.eq.s32.totalorder %s23, 1
      %p172 = scmp.ne.s32.totalorder %s167, %s169
      %p173 = scmp.eq.s32.totalorder %s23, 0
      %p174 = por %p172, %p173
      %p175 = scmp.ne.s32.totalorder %s167, %s169
      %p176 = scmp.eq.s32.totalorder %s28, 1
      %p177 = por %p175, %p176
      %p178 = scmp.ne.s32.totalorder %s169, %s170
      %p179 = scmp.eq.s32.totalorder %s28, 0
      %p180 = por %p178, %p179
      %p181 = scmp.ne.s32.totalorder %s169, %s170
      %p182 = scmp.eq.s32.totalorder %s29, 1
      %p183 = por %p181, %p182
      %p185 = scmp.ne.s32.totalorder %s170, %s184
      %p186 = scmp.eq.s32.totalorder %s29, 0
      %p187 = por %p185, %p186
      %s189 = sadd.s32 %s188, 1
      %p192 = scmp.eq.s32.totalorder %s23, 1
      %p193 = scmp.ne.s32.totalorder %s188, %s190
      %p194 = scmp.eq.s32.totalorder %s23, 0
      %p195 = por %p193, %p194
      %p196 = scmp.ne.s32.totalorder %s188, %s190
      %p197 = scmp.eq.s32.totalorder %s28, 1
      %p198 = por %p196, %p197
      %p199 = scmp.ne.s32.totalorder %s190, %s191
      %p200 = scmp.eq.s32.totalorder %s28, 0
      %p201 = por %p199, %p200
      %p202 = scmp.ne.s32.totalorder %s190, %s191
      %p203 = scmp.eq.s32.totalorder %s29, 1
      %p204 = por %p202, %p203
      %p206 = scmp.ne.s32.totalorder %s191, %s205
      %p207 = scmp.eq.s32.totalorder %s29, 0
      %p208 = por %p206, %p207
      %s210 = sadd.s32 %s209, 1
      %p213 = scmp.eq.s32.totalorder %s23, 1
      %p214 = scmp.ne.s32.totalorder %s209, %s211
      %p215 = scmp.eq.s32.totalorder %s23, 0
      %p216 = por %p214, %p215
      %p217 = scmp.ne.s32.totalorder %s209, %s211
      %p218 = scmp.eq.s32.totalorder %s28, 1
      %p219 = por %p217, %p218
      %p220 = scmp.ne.s32.totalorder %s211, %s212
      %p221 = scmp.eq.s32.totalorder %s28, 0
      %p222 = por %p220, %p221
      %p223 = scmp.ne.s32.totalorder %s211, %s212
      %p224 = scmp.eq.s32.totalorder %s29, 1
      %p225 = por %p223, %p224
      %p227 = scmp.ne.s32.totalorder %s212, %s226
      %p228 = scmp.eq.s32.totalorder %s29, 0
      %p229 = por %p227, %p228
      %s230 = ssub.s32 %s23, %s30
      %p231 = scmp.eq.s32.totalorder %s230, 0
      %s233 = sadd.s32 %s232, 1
      %s234 = scalar_select %p231, %s232, %s233
      %p237 = pneg %p231
      %p238 = scmp.eq.s32.totalorder %s23, 1
      %p239 = por %p237, %p238
      %p240 = scmp.ne.s32.totalorder %s232, %s235
      %p241 = scmp.eq.s32.totalorder %s23, 0
      %p242 = por %p240, %p241
      %p243 = scmp.ne.s32.totalorder %s232, %s235
      %p244 = scmp.eq.s32.totalorder %s28, 1
      %p245 = por %p243, %p244
      %p246 = scmp.ne.s32.totalorder %s235, %s236
      %p247 = scmp.eq.s32.totalorder %s28, 0
      %p248 = por %p246, %p247
      %p249 = scmp.ne.s32.totalorder %s235, %s236
      %p250 = scmp.eq.s32.totalorder %s29, 1
      %p251 = por %p249, %p250
      %p253 = scmp.ne.s32.totalorder %s236, %s252
      %p254 = scmp.eq.s32.totalorder %s29, 0
      %p255 = por %p253, %p254
      %p256 = scmp.le.s32.totalorder 1, %s23
      %p257 = scmp.lt.s32.totalorder %s23, 3
      %p258 = pnand %p256, %p257
      %p259 = pneg %p258
      // Predicated region
      $region9: #{tpu_custom_call.1} parent=5 // pred_check
        _
      $region10: #{tpu_custom_call.1} parent=5 // pred_check_branch
        %261 = sbr.rel (%p258) target = $region12
      $region11: #{tpu_custom_call.1} parent=5 // pred_region
        %s262 = ssub.s32 %s23, 1
        // Predicated region
        $region13: #{tpu_custom_call.1} parent=11 // pred_check
          %p263 = pneg %p96
        $region14: #{tpu_custom_call.1} parent=11 // pred_check_branch
          %265 = sbr.rel (%p263) target = $region16
        $region15: #{tpu_custom_call.1} parent=11 // pred_region
          %s267 = ssub.s32 256, 256
          %268 = vsyncadd [#allocation7], %s267
          %s269 = sshll.u32 [#allocation6], 4
          %s270 = int_to_ptr.vmem [resolvable:$true] %s269
          %275 = dma.hbm_to_vmem [thread:$0]  %s2, 256, %s270, [#allocation7], 128, 128, 8
        $region16: #{tpu_custom_call.1} parent=11 // pred_fallthru
          _
        // Predicated region
        $region17: #{tpu_custom_call.1} parent=11 // pred_check
          %p276 = pneg %p117
        $region18: #{tpu_custom_call.1} parent=11 // pred_check_branch
          %278 = sbr.rel (%p276) target = $region20
        $region19: #{tpu_custom_call.1} parent=11 // pred_region
          _
        $region20: #{tpu_custom_call.1} parent=11 // pred_fallthru
          _
        // Predicated region
        $region21: #{tpu_custom_call.1} parent=11 // pred_check
          %p279 = pneg %p138
        $region22: #{tpu_custom_call.1} parent=11 // pred_check_branch
          %281 = sbr.rel (%p279) target = $region24
        $region23: #{tpu_custom_call.1} parent=11 // pred_region
          _
        $region24: #{tpu_custom_call.1} parent=11 // pred_fallthru
          _
        // Predicated region
        $region25: #{tpu_custom_call.1} parent=11 // pred_check
          %p282 = pneg %p159
        $region26: #{tpu_custom_call.1} parent=11 // pred_check_branch
          %284 = sbr.rel (%p282) target = $region28
        $region27: #{tpu_custom_call.1} parent=11 // pred_region
          %s286 = ssub.s32 128, 128
          %287 = vsyncadd [#allocation7], %s286
          %s289 = sshll.u32 [#allocation8], 4
          %s290 = int_to_ptr.vmem [resolvable:$true] %s289
          %292 = dma.hbm_to_vmem [thread:$0]  %s5, 128, %s290, [#allocation7]
        $region28: #{tpu_custom_call.1} parent=11 // pred_fallthru
          _
        // Predicated region
        $region29: #{tpu_custom_call.1} parent=11 // pred_check
          %p293 = pneg %p180
        $region30: #{tpu_custom_call.1} parent=11 // pred_check_branch
          %295 = sbr.rel (%p293) target = $region32
        $region31: #{tpu_custom_call.1} parent=11 // pred_region
          _
        $region32: #{tpu_custom_call.1} parent=11 // pred_fallthru
          _
        // Predicated region
        $region33: #{tpu_custom_call.1} parent=11 // pred_check
          %p296 = pneg %p201
        $region34: #{tpu_custom_call.1} parent=11 // pred_check_branch
          %298 = sbr.rel (%p296) target = $region36
        $region35: #{tpu_custom_call.1} parent=11 // pred_region
          _
        $region36: #{tpu_custom_call.1} parent=11 // pred_fallthru
          _
        // Predicated region
        $region37: #{tpu_custom_call.1} parent=11 // pred_check
          %p299 = pneg %p222
        $region38: #{tpu_custom_call.1} parent=11 // pred_check_branch
          %301 = sbr.rel (%p299) target = $region40
        $region39: #{tpu_custom_call.1} parent=11 // pred_region
          _
        $region40: #{tpu_custom_call.1} parent=11 // pred_fallthru
          _
      $region12: #{tpu_custom_call.1} parent=5 // pred_fallthru
        _
      %p302 = scmp.lt.s32.totalorder %s23, 2
      // Predicated region
      $region41: #{tpu_custom_call.1} parent=5 // pred_check
        %p303 = pneg %p302
      $region42: #{tpu_custom_call.1} parent=5 // pred_check_branch
        %305 = sbr.rel (%p303) target = $region44
      $region43: #{tpu_custom_call.1} parent=5 // pred_region
        // Predicated region
        $region45: #{tpu_custom_call.1} parent=43 // pred_check
          %p306 = pneg %p43
        $region46: #{tpu_custom_call.1} parent=43 // pred_check_branch
          %308 = sbr.rel (%p306) target = $region48
        $region47: #{tpu_custom_call.1} parent=43 // pred_region
          %s309 = sand.u32 %s33, 1
          %s310 = scalar_lea.sflag [#allocation4], %s309
          %s311 = sand.u32 %s33, 1
          %s312 = smul.addr %s311, 8
          %s313 = scalar_lea.vmem [#allocation3], %s312
          %s315 = ssub.s32 128, 128
          %316 = vsyncadd %s310, %s315
          %s317 = smul.addr %s23, 128
          %s318 = scalar_lea.hbm %s0, %s317
          %s320 = sshll.u32 %s313, 4
          %s321 = int_to_ptr.vmem [resolvable:$true] %s320
          %323 = dma.hbm_to_vmem [thread:$0]  %s318, 128, %s321, %s310
        $region48: #{tpu_custom_call.1} parent=43 // pred_fallthru
          _
        // Predicated region
        $region49: #{tpu_custom_call.1} parent=43 // pred_check
          %p324 = pneg %p69
        $region50: #{tpu_custom_call.1} parent=43 // pred_check_branch
          %326 = sbr.rel (%p324) target = $region52
        $region51: #{tpu_custom_call.1} parent=43 // pred_region
          %p327 = scmp.lt.s32.totalorder %s23, 1
          %s328 = scalar_select %p327, %s23, 1
          %s329 = smul.addr %s328, 8
          %s330 = scalar_lea.vmem %s1, %s329
        $region52: #{tpu_custom_call.1} parent=43 // pred_fallthru
          _
      $region44: #{tpu_custom_call.1} parent=5 // pred_fallthru
        _
      %p331 = scmp.le.s32.totalorder 1, %s23
      %p332 = scmp.lt.s32.totalorder %s23, 3
      %p333 = pnand %p331, %p332
      %p334 = pneg %p333
      // Predicated region
      $region53: #{tpu_custom_call.1} parent=5 // pred_check
        _
      $region54: #{tpu_custom_call.1} parent=5 // pred_check_branch
        %336 = sbr.rel (%p333) target = $region56
      $region55: #{tpu_custom_call.1} parent=5 // pred_region
        %s337 = ssub.s32 %s23, 1
        %s338 = sand.u32 %s36, 1
        %s339 = scalar_lea.sflag [#allocation4], %s338
        %s340 = sand.u32 %s36, 1
        %s341 = smul.addr %s340, 8
        %s342 = scalar_lea.vmem [#allocation3], %s341
        // Predicated region
        $region57: #{tpu_custom_call.1} parent=55 // pred_check
          %p343 = pneg %p49
        $region58: #{tpu_custom_call.1} parent=55 // pred_check_branch
          %345 = sbr.rel (%p343) target = $region60
        $region59: #{tpu_custom_call.1} parent=55 // pred_region
          %346 = dma.done %s339, 128
        $region60: #{tpu_custom_call.1} parent=55 // pred_fallthru
          _
        // Predicated region
        $region61: #{tpu_custom_call.1} parent=55 // pred_check
          %p347 = pneg %p96
        $region62: #{tpu_custom_call.1} parent=55 // pred_check_branch
          %349 = sbr.rel (%p347) target = $region64
        $region63: #{tpu_custom_call.1} parent=55 // pred_region
          %350 = dma.done [#allocation7], 256
        $region64: #{tpu_custom_call.1} parent=55 // pred_fallthru
          _
        // Predicated region
        $region65: #{tpu_custom_call.1} parent=55 // pred_check
          %p351 = pneg %p159
        $region66: #{tpu_custom_call.1} parent=55 // pred_check_branch
          %353 = sbr.rel (%p351) target = $region68
        $region67: #{tpu_custom_call.1} parent=55 // pred_region
          %354 = dma.done [#allocation7], 128
        $region68: #{tpu_custom_call.1} parent=55 // pred_fallthru
          _
        %s355 = sand.u32 %s36, 1
        %s356 = scalar_lea.sflag [#allocation4], %s355
        %s357 = sand.u32 %s36, 1
        %s358 = smul.addr %s357, 8
        %s359 = scalar_lea.vmem [#allocation3], %s358
        %p360 = pneg %p49
        %p361 = pneg %p46
        %p362 = scmp.lt.s32.totalorder %s28, 1
        %s363 = scalar_select %p362, %s28, 1
        %s364 = smul.addr %s363, 8
        %s365 = scalar_lea.vmem %s1, %s364
        %p366 = pneg %p75
        %p367 = pneg %p72
        %p368 = pneg %p96
        %p369 = pneg %p93
        %p370 = pneg %p117
        %p371 = pneg %p114
        %p372 = pneg %p138
        %p373 = pneg %p135
        %p374 = pneg %p159
        %p375 = pneg %p156
        %p376 = pneg %p180
        %p377 = pneg %p177
        %p378 = pneg %p201
        %p379 = pneg %p198
        %p380 = pneg %p222
        %p381 = pneg %p219
        %p382 = pneg %p248
        %p383 = pneg %p245
        %s384 = sand.u32 %s235, 1
        %s385 = scalar_lea.sflag [#allocation5], %s384
        %s386 = sand.u32 %s235, 1
        %s387 = scalar_lea.vmem [#allocation9], %s386
        %p388 = scmp.lt.s32.totalorder %s28, 1
        %s389 = scalar_select %p388, %s28, 1
        %s390 = smul.addr %s389, 8
        %s391 = scalar_lea.vmem %s1, %s390
        %v392 = vld [vmem:[%s342] sm:$0xff]
        %v393 = vld [vmem:[#allocation6] sm:$0xff]
        %v394 = vld [vmem:[#allocation6 + $0x8] sm:$0xff]
        %v395 = vld [vmem:[%s3] sm:$0x1]
        %v397 = vlaneseq
        %v398 = vshrl.u32 %v397, 7
        %v399 = vsub.s32 0, %v398
        %v400 = vrot.slane %v395, %v399
        %vm402 = vcmask 130048
        %v404 = vsel %vm402, %v392, 0
        %406 = vmatprep.subr.mxu0 0.0
        %407 = vmatpush1.msra.mxu0 0.0
        %408 = vmatprep.subr.mxu0 0.0
        %409 = vmatpush1.msra.mxu0 0.0
        %410 = vmatprep.subr.mxu0 0.0
        %411 = vmatpush1.msra.mxu0 0.0
        %412 = vmatprep.subr.mxu0 0.0
        %413 = vmatpush1.msra.mxu0 0.0
        %414 = vmatprep.subr.mxu0 0.0
        %415 = vmatpush1.msra.mxu0 0.0
        %416 = vmatprep.subr.mxu0 0.0
        %417 = vmatpush1.msra.mxu0 0.0
        %418 = vmatprep.subr.mxu0 0.0
        %419 = vmatpush1.msra.mxu0 0.0
        %420 = vmatprep.subr.mxu0 0.0
        %421 = vmatpush1.msra.mxu0 0.0
        %422 = vmatprep.subr.mxu0 0.0
        %423 = vmatpush1.msra.mxu0 0.0
        %424 = vmatprep.subr.mxu0 0.0
        %425 = vmatpush1.msra.mxu0 0.0
        %426 = vmatprep.subr.mxu0 0.0
        %427 = vmatpush1.msra.mxu0 0.0
        %428 = vmatprep.subr.mxu0 0.0
        %429 = vmatpush1.msra.mxu0 0.0
        %430 = vmatprep.subr.mxu0 0.0
        %431 = vmatpush1.msra.mxu0 0.0
        %432 = vmatprep.subr.mxu0 0.0
        %433 = vmatpush1.msra.mxu0 0.0
        %434 = vmatprep.subr.mxu0 0.0
        %435 = vmatpush1.msra.mxu0 %v394
        %436 = vmatprep.subr.mxu0 0.0
        %437 = vmatpush1.msra.mxu0 %v393
        %438 = vmatprep.subr.mxu0 0.0
        %439 = vmatpush2.msra.mxu0 0.0
        %440 = vmatprep.subr.mxu0 0.0
        %441 = vmatpush2.msra.mxu0 0.0
        %442 = vmatprep.subr.mxu0 0.0
        %443 = vmatpush2.msra.mxu0 0.0
        %444 = vmatprep.subr.mxu0 0.0
        %445 = vmatpush2.msra.mxu0 0.0
        %446 = vmatprep.subr.mxu0 0.0
        %447 = vmatpush2.msra.mxu0 0.0
        %448 = vmatprep.subr.mxu0 0.0
        %449 = vmatpush2.msra.mxu0 0.0
        %450 = vmatprep.subr.mxu0 0.0
        %451 = vmatpush2.msra.mxu0 0.0
        %452 = vmatprep.subr.mxu0 0.0
        %453 = vmatpush2.msra.mxu0 0.0
        %454 = vmatprep.subr.mxu0 0.0
        %455 = vmatpush2.msra.mxu0 0.0
        %456 = vmatprep.subr.mxu0 0.0
        %457 = vmatpush2.msra.mxu0 0.0
        %458 = vmatprep.subr.mxu0 0.0
        %459 = vmatpush2.msra.mxu0 0.0
        %460 = vmatprep.subr.mxu0 0.0
        %461 = vmatpush2.msra.mxu0 0.0
        %462 = vmatprep.subr.mxu0 0.0
        %463 = vmatpush2.msra.mxu0 0.0
        %464 = vmatprep.subr.mxu0 0.0
        %465 = vmatpush2.msra.mxu0 0.0
        %466 = vmatprep.subr.mxu0 0.0
        %467 = vmatpush2.msra.mxu0 0.0
        %468 = vmatprep.subr.mxu0 0.0
        %469 = vmatpush2.msra.mxu0 0.0
        %470 = vmatprep.mubr.f32.mxu0 0.0
        %471 = vmatmul.mubr.f32.gmra.mxu0 %v404
        %v472 = vpop.f32.mrf.mxu0
        %v473 = vadd.f32 %v400, %v472
        %v474 = vpop.f32.mrf.mxu0
        %475 = vdwg.mxu0
        %v476 = vmax.f32 %v473, 0.0
        %v477 = vld [vmem:[%s4] sm:$0xff]
        %v478 = vld [vmem:[%s4 + $0x8] sm:$0xff]
        %v479 = vld [vmem:[%s4 + $0x10] sm:$0xff]
        %v480 = vld [vmem:[%s4 + $0x18] sm:$0xff]
        %v481 = vld [vmem:[%s391] sm:$0xff]
        %v482 = vld [vmem:[#allocation8] sm:$0xff]
        %vm483 = vcmask 64512
        %v485 = vsel %vm483, %v481, 0
        %487 = vmatprep.subr.mxu0 0.0
        %488 = vmatpush1.msra.mxu0 0.0
        %489 = vmatprep.subr.mxu0 0.0
        %490 = vmatpush1.msra.mxu0 0.0
        %491 = vmatprep.subr.mxu0 0.0
        %492 = vmatpush1.msra.mxu0 0.0
        %493 = vmatprep.subr.mxu0 0.0
        %494 = vmatpush1.msra.mxu0 0.0
        %495 = vmatprep.subr.mxu0 0.0
        %496 = vmatpush1.msra.mxu0 0.0
        %497 = vmatprep.subr.mxu0 0.0
        %498 = vmatpush1.msra.mxu0 0.0
        %499 = vmatprep.subr.mxu0 0.0
        %500 = vmatpush1.msra.mxu0 0.0
        %501 = vmatprep.subr.mxu0 0.0
        %502 = vmatpush1.msra.mxu0 0.0
        %503 = vmatprep.subr.mxu0 0.0
        %504 = vmatpush1.msra.mxu0 0.0
        %505 = vmatprep.subr.mxu0 0.0
        %506 = vmatpush1.msra.mxu0 0.0
        %507 = vmatprep.subr.mxu0 0.0
        %508 = vmatpush1.msra.mxu0 0.0
        %509 = vmatprep.subr.mxu0 0.0
        %510 = vmatpush1.msra.mxu0 0.0
        %511 = vmatprep.subr.mxu0 0.0
        %512 = vmatpush1.msra.mxu0 0.0
        %513 = vmatprep.subr.mxu0 0.0
        %514 = vmatpush1.msra.mxu0 0.0
        %515 = vmatprep.subr.mxu0 0.0
        %516 = vmatpush1.msra.mxu0 0.0
        %517 = vmatprep.subr.mxu0 0.0
        %518 = vmatpush1.msra.mxu0 %v482
        %519 = vmatprep.subr.mxu0 0.0
        %520 = vmatpush2.msra.mxu0 0.0
        %521 = vmatprep.subr.mxu0 0.0
        %522 = vmatpush2.msra.mxu0 0.0
        %523 = vmatprep.subr.mxu0 0.0
        %524 = vmatpush2.msra.mxu0 0.0
        %525 = vmatprep.subr.mxu0 0.0
        %526 = vmatpush2.msra.mxu0 0.0
        %527 = vmatprep.subr.mxu0 0.0
        %528 = vmatpush2.msra.mxu0 0.0
        %529 = vmatprep.subr.mxu0 0.0
        %530 = vmatpush2.msra.mxu0 0.0
        %531 = vmatprep.subr.mxu0 0.0
        %532 = vmatpush2.msra.mxu0 0.0
        %533 = vmatprep.subr.mxu0 0.0
        %534 = vmatpush2.msra.mxu0 0.0
        %535 = vmatprep.subr.mxu0 0.0
        %536 = vmatpush2.msra.mxu0 0.0
        %537 = vmatprep.subr.mxu0 0.0
        %538 = vmatpush2.msra.mxu0 0.0
        %539 = vmatprep.subr.mxu0 0.0
        %540 = vmatpush2.msra.mxu0 0.0
        %541 = vmatprep.subr.mxu0 0.0
        %542 = vmatpush2.msra.mxu0 0.0
        %543 = vmatprep.subr.mxu0 0.0
        %544 = vmatpush2.msra.mxu0 0.0
        %545 = vmatprep.subr.mxu0 0.0
        %546 = vmatpush2.msra.mxu0 0.0
        %547 = vmatprep.subr.mxu0 0.0
        %548 = vmatpush2.msra.mxu0 0.0
        %549 = vmatprep.subr.mxu0 0.0
        %550 = vmatpush2.msra.mxu0 0.0
        %551 = vmatprep.mubr.f32.mxu0 0.0
        %552 = vmatmul.mubr.f32.gmra.mxu0 %v485
        %v553 = vpop.f32.mrf.mxu0
        %v554 = vadd.f32 0.0, %v553
        %v555 = vpop.f32.mrf.mxu0
        %556 = vdwg.mxu0
        %vm557 = vcmask 261120
        %v559 = vsel %vm557, %v476, 0
        %561 = vmatprep.subr.mxu0 0.0
        %562 = vmatpush1.msra.mxu0 0.0
        %563 = vmatprep.subr.mxu0 0.0
        %564 = vmatpush1.msra.mxu0 0.0
        %565 = vmatprep.subr.mxu0 0.0
        %566 = vmatpush1.msra.mxu0 0.0
        %567 = vmatprep.subr.mxu0 0.0
        %568 = vmatpush1.msra.mxu0 0.0
        %569 = vmatprep.subr.mxu0 0.0
        %570 = vmatpush1.msra.mxu0 0.0
        %571 = vmatprep.subr.mxu0 0.0
        %572 = vmatpush1.msra.mxu0 0.0
        %573 = vmatprep.subr.mxu0 0.0
        %574 = vmatpush1.msra.mxu0 0.0
        %575 = vmatprep.subr.mxu0 0.0
        %576 = vmatpush1.msra.mxu0 0.0
        %577 = vmatprep.subr.mxu0 0.0
        %578 = vmatpush1.msra.mxu0 0.0
        %579 = vmatprep.subr.mxu0 0.0
        %580 = vmatpush1.msra.mxu0 0.0
        %581 = vmatprep.subr.mxu0 0.0
        %582 = vmatpush1.msra.mxu0 0.0
        %583 = vmatprep.subr.mxu0 0.0
        %584 = vmatpush1.msra.mxu0 0.0
        %585 = vmatprep.subr.mxu0 0.0
        %586 = vmatpush1.msra.mxu0 %v480
        %587 = vmatprep.subr.mxu0 0.0
        %588 = vmatpush1.msra.mxu0 %v479
        %589 = vmatprep.subr.mxu0 0.0
        %590 = vmatpush1.msra.mxu0 %v478
        %591 = vmatprep.subr.mxu0 0.0
        %592 = vmatpush1.msra.mxu0 %v477
        %593 = vmatprep.subr.mxu0 0.0
        %594 = vmatpush2.msra.mxu0 0.0
        %595 = vmatprep.subr.mxu0 0.0
        %596 = vmatpush2.msra.mxu0 0.0
        %597 = vmatprep.subr.mxu0 0.0
        %598 = vmatpush2.msra.mxu0 0.0
        %599 = vmatprep.subr.mxu0 0.0
        %600 = vmatpush2.msra.mxu0 0.0
        %601 = vmatprep.subr.mxu0 0.0
        %602 = vmatpush2.msra.mxu0 0.0
        %603 = vmatprep.subr.mxu0 0.0
        %604 = vmatpush2.msra.mxu0 0.0
        %605 = vmatprep.subr.mxu0 0.0
        %606 = vmatpush2.msra.mxu0 0.0
        %607 = vmatprep.subr.mxu0 0.0
        %608 = vmatpush2.msra.mxu0 0.0
        %609 = vmatprep.subr.mxu0 0.0
        %610 = vmatpush2.msra.mxu0 0.0
        %611 = vmatprep.subr.mxu0 0.0
        %612 = vmatpush2.msra.mxu0 0.0
        %613 = vmatprep.subr.mxu0 0.0
        %614 = vmatpush2.msra.mxu0 0.0
        %615 = vmatprep.subr.mxu0 0.0
        %616 = vmatpush2.msra.mxu0 0.0
        %617 = vmatprep.subr.mxu0 0.0
        %618 = vmatpush2.msra.mxu0 0.0
        %619 = vmatprep.subr.mxu0 0.0
        %620 = vmatpush2.msra.mxu0 0.0
        %621 = vmatprep.subr.mxu0 0.0
        %622 = vmatpush2.msra.mxu0 0.0
        %623 = vmatprep.subr.mxu0 0.0
        %624 = vmatpush2.msra.mxu0 0.0
        %625 = vmatprep.mubr.f32.mxu0 0.0
        %626 = vmatmul.mubr.f32.gmra.mxu0 %v559
        %v627 = vpop.f32.mrf.mxu0
        %v628 = vadd.f32 %v554, %v627
        %v629 = vpop.f32.mrf.mxu0
        %630 = vdwg.mxu0
        %v631 = vld [vmem:[%s6] sm:$0x1]
        %v633 = vlaneseq
        %v634 = vshrl.u32 %v633, 7
        %v635 = vsub.s32 0, %v634
        %v636 = vrot.slane %v631, %v635
        %v638 = vadd.f32 %v628, %v636
        %v639 = vmax.f32 %v638, 0.0
        %v640 = vld [vmem:[%s7] sm:$0x1]
        %s641 = sld [smem:[#allocation2]]
        %v642 = vstv %s641
        %v644 = vsel %vm557, %v640, 0
        %v647 = vsel %vm557, %v639, 0
        %649 = vmatprep.subr.mxu0 0.0
        %650 = vmatpush1.xpose.msra.mxu0 0.0
        %651 = vmatprep.subr.mxu0 0.0
        %652 = vmatpush1.xpose.msra.mxu0 0.0
        %653 = vmatprep.subr.mxu0 0.0
        %654 = vmatpush1.xpose.msra.mxu0 0.0
        %655 = vmatprep.subr.mxu0 0.0
        %656 = vmatpush1.xpose.msra.mxu0 0.0
        %657 = vmatprep.subr.mxu0 0.0
        %658 = vmatpush1.xpose.msra.mxu0 0.0
        %659 = vmatprep.subr.mxu0 0.0
        %660 = vmatpush1.xpose.msra.mxu0 0.0
        %661 = vmatprep.subr.mxu0 0.0
        %662 = vmatpush1.xpose.msra.mxu0 0.0
        %663 = vmatprep.subr.mxu0 0.0
        %664 = vmatpush1.xpose.msra.mxu0 0.0
        %665 = vmatprep.subr.mxu0 0.0
        %666 = vmatpush1.xpose.msra.mxu0 0.0
        %667 = vmatprep.subr.mxu0 0.0
        %668 = vmatpush1.xpose.msra.mxu0 0.0
        %669 = vmatprep.subr.mxu0 0.0
        %670 = vmatpush1.xpose.msra.mxu0 0.0
        %671 = vmatprep.subr.mxu0 0.0
        %672 = vmatpush1.xpose.msra.mxu0 0.0
        %673 = vmatprep.subr.mxu0 0.0
        %674 = vmatpush1.xpose.msra.mxu0 0.0
        %675 = vmatprep.subr.mxu0 0.0
        %676 = vmatpush1.xpose.msra.mxu0 0.0
        %677 = vmatprep.subr.mxu0 0.0
        %678 = vmatpush1.xpose.msra.mxu0 0.0
        %679 = vmatprep.subr.mxu0 0.0
        %680 = vmatpush1.xpose.msra.mxu0 %v647
        %681 = vmatprep.subr.mxu0 0.0
        %682 = vmatpush2.xpose.msra.mxu0 0.0
        %683 = vmatprep.subr.mxu0 0.0
        %684 = vmatpush2.xpose.msra.mxu0 0.0
        %685 = vmatprep.subr.mxu0 0.0
        %686 = vmatpush2.xpose.msra.mxu0 0.0
        %687 = vmatprep.subr.mxu0 0.0
        %688 = vmatpush2.xpose.msra.mxu0 0.0
        %689 = vmatprep.subr.mxu0 0.0
        %690 = vmatpush2.xpose.msra.mxu0 0.0
        %691 = vmatprep.subr.mxu0 0.0
        %692 = vmatpush2.xpose.msra.mxu0 0.0
        %693 = vmatprep.subr.mxu0 0.0
        %694 = vmatpush2.xpose.msra.mxu0 0.0
        %695 = vmatprep.subr.mxu0 0.0
        %696 = vmatpush2.xpose.msra.mxu0 0.0
        %697 = vmatprep.subr.mxu0 0.0
        %698 = vmatpush2.xpose.msra.mxu0 0.0
        %699 = vmatprep.subr.mxu0 0.0
        %700 = vmatpush2.xpose.msra.mxu0 0.0
        %701 = vmatprep.subr.mxu0 0.0
        %702 = vmatpush2.xpose.msra.mxu0 0.0
        %703 = vmatprep.subr.mxu0 0.0
        %704 = vmatpush2.xpose.msra.mxu0 0.0
        %705 = vmatprep.subr.mxu0 0.0
        %706 = vmatpush2.xpose.msra.mxu0 0.0
        %707 = vmatprep.subr.mxu0 0.0
        %708 = vmatpush2.xpose.msra.mxu0 0.0
        %709 = vmatprep.subr.mxu0 0.0
        %710 = vmatpush2.xpose.msra.mxu0 0.0
        %711 = vmatprep.subr.mxu0 0.0
        %712 = vmatpush2.xpose.msra.mxu0 0.0
        %713 = vmatprep.mubr.f32.mxu0 0.0
        %714 = vmatmul.mubr.f32.gmra.mxu0 %v644
        %v715 = vpop.f32.mrf.mxu0
        %v716 = vadd.f32 %v642, %v715
        %v717 = vpop.f32.mrf.mxu0
        %718 = vdwg.mxu0
        %vm719 = vcmask 57344
        %720 = vst.msk [vmem:[%s387] sm:$0x1] %vm719, %v716
        %s721 = sand.u32 %s235, 1
        %s722 = scalar_lea.sflag [#allocation5], %s721
        %s723 = sand.u32 %s235, 1
        %s724 = scalar_lea.vmem [#allocation9], %s723
        // Predicated region
        $region69: #{tpu_custom_call.1} parent=55 // pred_check
          %p725 = pneg %p245
        $region70: #{tpu_custom_call.1} parent=55 // pred_check_branch
          %727 = sbr.rel (%p725) target = $region72
        $region71: #{tpu_custom_call.1} parent=55 // pred_region
          %s729 = ssub.s32 16, 16
          %730 = vsyncadd %s722, %s729
          %s731 = smul.addr %s28, 16
          %s732 = scalar_lea.hbm %s9, %s731
          %s734 = sshll.u32 %s724, 4
          %s735 = int_to_ptr.vmem [resolvable:$true] %s734
          %737 = dma.vmem_to_hbm [thread:$0]  %s735, 16, %s732, %s722
        $region72: #{tpu_custom_call.1} parent=55 // pred_fallthru
          _
      $region56: #{tpu_custom_call.1} parent=5 // pred_fallthru
        _
      %p738 = scmp.le.s32.totalorder 2, %s23
      // Predicated region
      $region73: #{tpu_custom_call.1} parent=5 // pred_check
        %p739 = pneg %p738
      $region74: #{tpu_custom_call.1} parent=5 // pred_check_branch
        %741 = sbr.rel (%p739) target = $region76
      $region75: #{tpu_custom_call.1} parent=5 // pred_region
        %s742 = ssub.s32 %s23, 2
        // Predicated region
        $region77: #{tpu_custom_call.1} parent=75 // pred_check
          %p743 = pneg %p251
        $region78: #{tpu_custom_call.1} parent=75 // pred_check_branch
          %745 = sbr.rel (%p743) target = $region80
        $region79: #{tpu_custom_call.1} parent=75 // pred_region
          %s746 = sand.u32 %s236, 1
          %s747 = scalar_lea.sflag [#allocation5], %s746
          %s748 = sand.u32 %s236, 1
          %s749 = scalar_lea.vmem [#allocation9], %s748
          %750 = dma.done %s747, 16
        $region80: #{tpu_custom_call.1} parent=75 // pred_fallthru
          _
      $region76: #{tpu_custom_call.1} parent=5 // pred_fallthru
        _
    $region6: #{tpu_custom_call.1} parent=1 // loop_footer
      %s27 = sadd.s32 1, %s23
    $region7: #{tpu_custom_call.1} parent=1 // loop_footer_branch
      %22 = sbr.rel target = $region3
    $region8: #{tpu_custom_call.1} parent=1 // loop_exit
      _
    %751 = vsyncpa [#allocation4], 1
    %s752 = scalar_lea.sflag [#allocation4], 1
    %753 = vsyncpa %s752, 1
    %754 = vsyncpa [#allocation7], 1
    %755 = vsyncpa [#allocation5], 1
    %s756 = scalar_lea.sflag [#allocation5], 1
    %757 = vsyncpa %s756, 1

</llo_original>
